<compile_context>
chip_gen: v7x
topology: tpu7x:2x2x1
jax: 0.10.0
libtpu: 0.0.40
codegen_flags: <defaults>
</compile_context>

<pallas_src>
import jax
import jax.numpy as jnp
from jax import lax
from jax.experimental import pallas as pl
from jax.experimental.pallas import tpu as pltpu


# ----------------------------- configuration --------------------------------
B = 2                # batch
DIM_V = 32           # input_v channels (opt['dim_v'])
W = H = 4            # spatial
P = W * H            # positions (W*H)
DIM_Q = 32           # question vector dim (opt['dim_q'])
ATT_DIM = 32         # attention dim_v == dim_q == dim_mm (elementwise fusion)
G = 2                # nb_glimpses
DIM_H = 32           # per-glimpse fusion hidden
NUM_CLASSES = 10     # len(vocab_answers)
OUT_PAD = 128        # lane-dense classifier width (cropped to NUM_CLASSES outside)
VOCAB = 50
SEQ = 8

# ----------------- packed weight slab layout (rows, lane width = 128) --------
# All row offsets are multiples of 8 (sublane aligned); every piece starts at lane 0.
R_WV   = 0                       # wv_att   (DIM_V, ATT_DIM)
R_WQ   = R_WV + DIM_V            # wq_att   (DIM_Q, ATT_DIM)
R_WATT = R_WQ + DIM_Q            # watt     (ATT_DIM, G)
R_WQF  = R_WATT + ATT_DIM        # wq_fus   (DIM_Q, G*DIM_H)
R_WFUS = R_WQF + DIM_Q           # wfus_bd  (G*DIM_V, G*DIM_H)  block-diagonal
R_WCLS = R_WFUS + G * DIM_V      # wcls_pad (G*DIM_H, OUT_PAD)
R_BIAS = R_WCLS + G * DIM_H      # 6 bias rows (one per bias, lane 0 aligned)
SLAB_ROWS = ((R_BIAS + 6 + 7) // 8) * 8


# ------------------------------- kernel -------------------------------------
def abstract_att_kernel(v_ref, q_ref, w_ref, out_ref):
    # v_ref: (B*P, DIM_V)   image features, batch folded into rows
    # q_ref: (B, DIM_Q)     question vectors
    # w_ref: (SLAB_ROWS, OUT_PAD) packed weights/biases (single DMA)
    # out_ref: (B, OUT_PAD) lane-dense logits (cropped outside)
    v = v_ref[...]                                    # (B*P, DIM_V)
    q = q_ref[...]                                    # (B, DIM_Q)

    # static slices of the weight slab (zero runtime cost views -> loads)
    wv   = w_ref[R_WV:R_WV + DIM_V, :ATT_DIM]
    wq   = w_ref[R_WQ:R_WQ + DIM_Q, :ATT_DIM]
    watt = w_ref[R_WATT:R_WATT + ATT_DIM, :G]
    wqf  = w_ref[R_WQF:R_WQF + DIM_Q, :G * DIM_H]
    wfus = w_ref[R_WFUS:R_WFUS + G * DIM_V, :G * DIM_H]
    wcls = w_ref[R_WCLS:R_WCLS + G * DIM_H, :OUT_PAD]
    bv   = w_ref[R_BIAS + 0:R_BIAS + 1, :ATT_DIM]
    bq   = w_ref[R_BIAS + 1:R_BIAS + 2, :ATT_DIM]
    batt = w_ref[R_BIAS + 2:R_BIAS + 3, :G]
    bqf  = w_ref[R_BIAS + 3:R_BIAS + 4, :G * DIM_H]
    bfus = w_ref[R_BIAS + 4:R_BIAS + 5, :G * DIM_H]
    bcls = w_ref[R_BIAS + 5:R_BIAS + 6, :OUT_PAD]

    # -------- _attention --------
    # dropout_v / dropout_q / dropout_mm are identity in eval mode.
    x_v = jnp.tanh(jnp.dot(v, wv, preferred_element_type=jnp.float32) + bv)   # (B*P, ATT)
    x_q = jnp.tanh(jnp.dot(q, wq, preferred_element_type=jnp.float32) + bq)   # (B, ATT)

    # _fusion_att == elementwise mul (x_q broadcast over positions), then tanh.
    x_att3 = jnp.tanh(x_v.reshape(B, P, ATT_DIM) * x_q[:, None, :])           # (B, P, ATT)
    scores = jnp.dot(x_att3.reshape(B * P, ATT_DIM), watt,
                     preferred_element_type=jnp.float32) + batt               # (B*P, G)
    scores3 = scores.reshape(B, P, G)

    # per-(batch, glimpse) softmax over positions (F.softmax on (B, P) tensors)
    m = jnp.max(scores3, axis=1, keepdims=True)
    e = jnp.exp(scores3 - m)
    s = jnp.sum(e, axis=1, keepdims=True)
    att3 = e * pl.reciprocal(s, approx=True)                                  # (B, P, G)

    # attention-weighted sums of the *original* visual features:
    # contraction over P, batch over B -- no explicit transpose.
    v3 = v.reshape(B, P, DIM_V)
    v_att = lax.dot_general(att3, v3,
                            dimension_numbers=(((1,), (1,)), ((0,), (0,))),
                            preferred_element_type=jnp.float32)               # (B, G, DIM_V)

    # -------- _fusion_glimpses --------
    # flatten glimpse axis into lanes, then a single block-diagonal matmul
    # replaces the G separate per-glimpse linears + concat of results.
    v_att_flat = jnp.concatenate([v_att[:, g, :] for g in range(G)], axis=-1)  # (B, G*DIM_V)
    x_vf = jnp.tanh(jnp.dot(v_att_flat, wfus,
                            preferred_element_type=jnp.float32) + bfus)        # (B, G*DIM_H)
    x_qf = jnp.tanh(jnp.dot(q, wqf,
                            preferred_element_type=jnp.float32) + bqf)         # (B, G*DIM_H)
    x = jnp.tanh(x_vf * x_qf)   # _fusion_classif (mul) + classif activation (tanh)

    # -------- _classif -------- (classif dropout is identity in eval mode)
    out_ref[...] = jnp.dot(x, wcls, preferred_element_type=jnp.float32) + bcls  # (B, OUT_PAD)


# ------------------------------- wrapper -------------------------------------
def pack_params(params):
    """Pack all weights/biases into one 128-lane f32 slab (built once, cacheable)."""
    f32 = jnp.float32

    # block-diagonal glimpse-fusion weight: block g maps v_att[:, g, :] -> glimpse-g hidden
    wfus_bd = jnp.zeros((G * DIM_V, G * DIM_H), f32)
    for g in range(G):
        wfus_bd = wfus_bd.at[g * DIM_V:(g + 1) * DIM_V,
                             g * DIM_H:(g + 1) * DIM_H].set(params["wfus_v"][g])
    bfus_flat = params["bfus_v"].reshape(1, G * DIM_H)

    # lane-dense (128-wide) classifier; extra columns are zero and cropped outside
    wcls_pad = jnp.zeros((G * DIM_H, OUT_PAD), f32).at[:, :NUM_CLASSES].set(params["wcls"])
    bcls_pad = jnp.zeros((1, OUT_PAD), f32).at[:, :NUM_CLASSES].set(params["bcls"])

    slab = jnp.zeros((SLAB_ROWS, OUT_PAD), f32)

    def put(s, row, a):
        return s.at[row:row + a.shape[0], :a.shape[1]].set(a)

    slab = put(slab, R_WV,   params["wv_att"])
    slab = put(slab, R_WQ,   params["wq_att"])
    slab = put(slab, R_WATT, params["watt"])
    slab = put(slab, R_WQF,  params["wq_fus"])
    slab = put(slab, R_WFUS, wfus_bd)
    slab = put(slab, R_WCLS, wcls_pad)
    slab = put(slab, R_BIAS + 0, params["bv_att"])
    slab = put(slab, R_BIAS + 1, params["bq_att"])
    slab = put(slab, R_BIAS + 2, params["batt"])
    slab = put(slab, R_BIAS + 3, params["bq_fus"])
    slab = put(slab, R_BIAS + 4, bfus_flat)
    slab = put(slab, R_BIAS + 5, bcls_pad)
    return slab


def abstract_att_forward(input_v_nchw, x_q_vec, params):
    """input_v_nchw: (B, DIM_V, W, H) f32; x_q_vec: (B, DIM_Q) f32 -> (B, NUM_CLASSES)."""
    b, c, w, h = input_v_nchw.shape
    p = w * h
    assert (b, c, p) == (B, DIM_V, P) and x_q_vec.shape == (B, DIM_Q)

    # NCHW -> (B, P, C) -> (B*P, C): identical to .view(B, C, W*H).transpose(1, 2),
    # with batch folded into the matmul M dimension.
    v_flat = jnp.transpose(input_v_nchw.reshape(b, c, p), (0, 2, 1)).reshape(b * p, c)
    slab = pack_params(params)   # single weight DMA; cache this in a real model

    out = pl.pallas_call(
        abstract_att_kernel,
        out_shape=jax.ShapeDtypeStruct((B, OUT_PAD), jnp.float32),
        grid=(1,),   # whole (tiny) problem in one invocation; no per-batch grid steps
        in_specs=[
            pl.BlockSpec((B * P, DIM_V), lambda i: (0, 0)),
            pl.BlockSpec((B, DIM_Q), lambda i: (0, 0)),
            pl.BlockSpec((SLAB_ROWS, OUT_PAD), lambda i: (0, 0)),
        ],
        out_specs=pl.BlockSpec((B, OUT_PAD), lambda i: (0, 0)),
        compiler_params=pltpu.CompilerParams(dimension_semantics=("arbitrary",)),
    )(v_flat, x_q_vec, slab)
    return out[:, :NUM_CLASSES]


# ------------------------- pure-JAX reference --------------------------------
def reference_forward(input_v_nchw, x_q_vec, params):
    b, c, w, h = input_v_nchw.shape
    v = jnp.transpose(input_v_nchw.reshape(b, c, w * h), (0, 2, 1))          # (B, P, C)
    x_v = jnp.tanh(v @ params["wv_att"] + params["bv_att"])
    x_q = jnp.tanh(x_q_vec @ params["wq_att"] + params["bq_att"])[:, None, :]
    x_att = jnp.tanh(x_v * x_q)
    scores = x_att @ params["watt"] + params["batt"]                          # (B, P, G)
    att = jax.nn.softmax(scores, axis=1)
    v_att = jnp.einsum("bpg,bpc->bgc", att, v)                                # (B, G, C)
    pieces = [jnp.tanh(v_att[:, g] @ params["wfus_v"][g] + params["bfus_v"][g])
              for g in range(G)]
    x_vf = jnp.concatenate(pieces, axis=1)
    x_qf = jnp.tanh(x_q_vec @ params["wq_fus"] + params["bq_fus"])
    x = jnp.tanh(x_vf * x_qf)
    return x @ params["wcls"] + params["bcls"]


# --------------------------------- main ---------------------------------------
if __name__ == "__main__":
    key = jax.random.PRNGKey(0)
    ks = jax.random.split(key, 16)

    def init(k, shape, scale=0.1):
        return (scale * jax.random.normal(k, shape)).astype(jnp.float32)

    params = {
        "wv_att": init(ks[0], (DIM_V, ATT_DIM)),
        "bv_att": init(ks[1], (1, ATT_DIM)),
        "wq_att": init(ks[2], (DIM_Q, ATT_DIM)),
        "bq_att": init(ks[3], (1, ATT_DIM)),
        "watt":   init(ks[4], (ATT_DIM, G)),
        "batt":   init(ks[5], (1, G)),
        "wfus_v": init(ks[6], (G, DIM_V, DIM_H)),
        "bfus_v": init(ks[7], (G, DIM_H)),
        "wq_fus": init(ks[8], (DIM_Q, G * DIM_H)),
        "bq_fus": init(ks[9], (1, G * DIM_H)),
        "wcls":   init(ks[10], (G * DIM_H, NUM_CLASSES)),
        "bcls":   init(ks[11], (1, NUM_CLASSES)),
        "emb":    init(ks[12], (VOCAB, DIM_Q), scale=0.5),
    }

    # example inputs
    input_v = jax.random.normal(ks[13], (B, DIM_V, W, H), dtype=jnp.float32)   # NCHW
    input_q = jax.random.randint(ks[14], (B, SEQ), 0, VOCAB)                   # token ids

    # seq2vec stand-in (plain-JAX glue): bag-of-words embedding sum + tanh
    x_q_vec = jnp.tanh(jnp.sum(params["emb"][input_q], axis=1))                # (B, DIM_Q)

    out = abstract_att_forward(input_v, x_q_vec, params)
    out = jax.block_until_ready(out)

    ref = reference_forward(input_v, x_q_vec, params)
    assert out.shape == (B, NUM_CLASSES)
    # Tolerance is loosened slightly because the softmax denominator uses the
    # approximate EUP reciprocal (pl.reciprocal(approx=True)); everything else is f32.
    assert jnp.allclose(out, ref, atol=2e-2, rtol=2e-2), (
        f"max abs err {jnp.max(jnp.abs(out - ref))}")

    print("KERNEL_OK")
</pallas_src>

<mosaic_0001>
module attributes {stable_mosaic.version = 11 : i64} {
  func.func @abstract_att_kernel(%arg0: i32, %arg1: memref<32x32xf32, #tpu.memory_space<vmem>>, %arg2: memref<2x32xf32, #tpu.memory_space<vmem>>, %arg3: memref<264x128xf32, #tpu.memory_space<vmem>>, %arg4: memref<2x128xf32, #tpu.memory_space<vmem>>) attributes {dimension_semantics = [#tpu.dimension_semantics<arbitrary>], iteration_bounds = array<i64: 1>, scalar_prefetch = 0 : i64, scratch_operands = 0 : i64, tpu.core_type = #tpu.core_type<tc>, window_params = [{pipeline_mode = #tpu.pipeline_mode<synchronous>, transform_indices = @transform_0, window_bounds = array<i64: 32, 32>}, {pipeline_mode = #tpu.pipeline_mode<synchronous>, transform_indices = @transform_1, window_bounds = array<i64: 2, 32>}, {pipeline_mode = #tpu.pipeline_mode<synchronous>, transform_indices = @transform_2, window_bounds = array<i64: 264, 128>}, {pipeline_mode = #tpu.pipeline_mode<synchronous>, transform_indices = @transform_3, window_bounds = array<i64: 2, 128>}]} {
    %c0 = arith.constant 0 : index
    %c0_0 = arith.constant 0 : index
    %0 = vector.load %arg1[%c0, %c0_0] : memref<32x32xf32, #tpu.memory_space<vmem>>, vector<32x32xf32>
    %c0_1 = arith.constant 0 : index
    %c0_2 = arith.constant 0 : index
    %1 = vector.load %arg2[%c0_1, %c0_2] : memref<2x32xf32, #tpu.memory_space<vmem>>, vector<2x32xf32>
    %c0_3 = arith.constant 0 : index
    %c0_4 = arith.constant 0 : index
    %2 = vector.load %arg3[%c0_3, %c0_4] : memref<264x128xf32, #tpu.memory_space<vmem>>, vector<32x32xf32>
    %c32 = arith.constant 32 : index
    %c0_5 = arith.constant 0 : index
    %3 = vector.load %arg3[%c32, %c0_5] : memref<264x128xf32, #tpu.memory_space<vmem>>, vector<32x32xf32>
    %c64 = arith.constant 64 : index
    %c0_6 = arith.constant 0 : index
    %4 = vector.load %arg3[%c64, %c0_6] : memref<264x128xf32, #tpu.memory_space<vmem>>, vector<32x2xf32>
    %c96 = arith.constant 96 : index
    %c0_7 = arith.constant 0 : index
    %5 = vector.load %arg3[%c96, %c0_7] : memref<264x128xf32, #tpu.memory_space<vmem>>, vector<32x64xf32>
    %c128 = arith.constant 128 : index
    %c0_8 = arith.constant 0 : index
    %6 = vector.load %arg3[%c128, %c0_8] : memref<264x128xf32, #tpu.memory_space<vmem>>, vector<64x64xf32>
    %c192 = arith.constant 192 : index
    %c0_9 = arith.constant 0 : index
    %7 = vector.load %arg3[%c192, %c0_9] : memref<264x128xf32, #tpu.memory_space<vmem>>, vector<64x128xf32>
    %c256 = arith.constant 256 : index
    %c0_10 = arith.constant 0 : index
    %8 = vector.load %arg3[%c256, %c0_10] : memref<264x128xf32, #tpu.memory_space<vmem>>, vector<1x32xf32>
    %c257 = arith.constant 257 : index
    %c0_11 = arith.constant 0 : index
    %9 = vector.load %arg3[%c257, %c0_11] : memref<264x128xf32, #tpu.memory_space<vmem>>, vector<1x32xf32>
    %c258 = arith.constant 258 : index
    %c0_12 = arith.constant 0 : index
    %10 = vector.load %arg3[%c258, %c0_12] : memref<264x128xf32, #tpu.memory_space<vmem>>, vector<1x2xf32>
    %c259 = arith.constant 259 : index
    %c0_13 = arith.constant 0 : index
    %11 = vector.load %arg3[%c259, %c0_13] : memref<264x128xf32, #tpu.memory_space<vmem>>, vector<1x64xf32>
    %c260 = arith.constant 260 : index
    %c0_14 = arith.constant 0 : index
    %12 = vector.load %arg3[%c260, %c0_14] : memref<264x128xf32, #tpu.memory_space<vmem>>, vector<1x64xf32>
    %c261 = arith.constant 261 : index
    %c0_15 = arith.constant 0 : index
    %13 = vector.load %arg3[%c261, %c0_15] : memref<264x128xf32, #tpu.memory_space<vmem>>, vector<1x128xf32>
    %cst = arith.constant dense<0.000000e+00> : vector<32x32xf32>
    %14 = tpu.matmul %0, %2, %cst {dimension_numbers = #tpu.dot_dimension_numbers<[1], [0], [0], [1], [0, 0, 1, 1], [], []>} : vector<32x32xf32>, vector<32x32xf32>, vector<32x32xf32> -> vector<32x32xf32>
    %15 = vector.broadcast %8 : vector<1x32xf32> to vector<32x32xf32>
    %16 = arith.addf %14, %15 : vector<32x32xf32>
    %17 = math.tanh %16 : vector<32x32xf32>
    %cst_16 = arith.constant dense<0.000000e+00> : vector<2x32xf32>
    %18 = tpu.matmul %1, %3, %cst_16 {dimension_numbers = #tpu.dot_dimension_numbers<[1], [0], [0], [1], [0, 0, 1, 1], [], []>} : vector<2x32xf32>, vector<32x32xf32>, vector<2x32xf32> -> vector<2x32xf32>
    %19 = vector.broadcast %9 : vector<1x32xf32> to vector<2x32xf32>
    %20 = arith.addf %18, %19 : vector<2x32xf32>
    %21 = math.tanh %20 : vector<2x32xf32>
    %22 = vector.shape_cast %17 : vector<32x32xf32> to vector<2x16x32xf32>
    %23 = vector.shape_cast %21 : vector<2x32xf32> to vector<2x1x32xf32>
    %24 = vector.broadcast %23 : vector<2x1x32xf32> to vector<2x16x32xf32>
    %25 = arith.mulf %22, %24 : vector<2x16x32xf32>
    %26 = math.tanh %25 : vector<2x16x32xf32>
    %27 = vector.shape_cast %26 : vector<2x16x32xf32> to vector<32x32xf32>
    %cst_17 = arith.constant dense<0.000000e+00> : vector<32x2xf32>
    %28 = tpu.matmul %27, %4, %cst_17 {dimension_numbers = #tpu.dot_dimension_numbers<[1], [0], [0], [1], [0, 0, 1, 1], [], []>} : vector<32x32xf32>, vector<32x2xf32>, vector<32x2xf32> -> vector<32x2xf32>
    %29 = vector.broadcast %10 : vector<1x2xf32> to vector<32x2xf32>
    %30 = arith.addf %28, %29 : vector<32x2xf32>
    %31 = vector.shape_cast %30 : vector<32x2xf32> to vector<2x16x2xf32>
    %cst_18 = arith.constant dense<0xFF800000> : vector<2x2xf32>
    %32 = vector.multi_reduction <maximumf>, %31, %cst_18 [1] : vector<2x16x2xf32> to vector<2x2xf32>
    %33 = vector.shape_cast %32 : vector<2x2xf32> to vector<2x1x2xf32>
    %34 = vector.broadcast %33 : vector<2x1x2xf32> to vector<2x16x2xf32>
    %35 = arith.subf %31, %34 : vector<2x16x2xf32>
    %36 = math.exp %35 : vector<2x16x2xf32>
    %cst_19 = arith.constant dense<0.000000e+00> : vector<2x2xf32>
    %37 = vector.multi_reduction <add>, %36, %cst_19 [1] : vector<2x16x2xf32> to vector<2x2xf32>
    %38 = vector.shape_cast %37 : vector<2x2xf32> to vector<2x1x2xf32>
    %39 = tpu.reciprocal %38 {approx = true} : vector<2x1x2xf32> -> vector<2x1x2xf32>
    %40 = vector.broadcast %39 : vector<2x1x2xf32> to vector<2x16x2xf32>
    %41 = arith.mulf %36, %40 : vector<2x16x2xf32>
    %42 = vector.shape_cast %0 : vector<32x32xf32> to vector<2x16x32xf32>
    %cst_20 = arith.constant dense<0.000000e+00> : vector<2x2x32xf32>
    %43 = tpu.matmul %41, %42, %cst_20 {dimension_numbers = #tpu.dot_dimension_numbers<[1], [1], [2], [2], [0, 0, 0, 2, 1, 2], [0], [0]>} : vector<2x16x2xf32>, vector<2x16x32xf32>, vector<2x2x32xf32> -> vector<2x2x32xf32>
    %44 = vector.extract_strided_slice %43 {offsets = [0, 0, 0], sizes = [2, 1, 32], strides = [1, 1, 1]} : vector<2x2x32xf32> to vector<2x1x32xf32>
    %45 = vector.shape_cast %44 : vector<2x1x32xf32> to vector<2x32xf32>
    %46 = vector.extract_strided_slice %43 {offsets = [0, 1, 0], sizes = [2, 1, 32], strides = [1, 1, 1]} : vector<2x2x32xf32> to vector<2x1x32xf32>
    %47 = vector.shape_cast %46 : vector<2x1x32xf32> to vector<2x32xf32>
    %48 = tpu.concatenate %45, %47 in 1 : vector<2x32xf32>, vector<2x32xf32> -> vector<2x64xf32>
    %cst_21 = arith.constant dense<0.000000e+00> : vector<2x64xf32>
    %49 = tpu.matmul %48, %6, %cst_21 {dimension_numbers = #tpu.dot_dimension_numbers<[1], [0], [0], [1], [0, 0, 1, 1], [], []>} : vector<2x64xf32>, vector<64x64xf32>, vector<2x64xf32> -> vector<2x64xf32>
    %50 = vector.broadcast %12 : vector<1x64xf32> to vector<2x64xf32>
    %51 = arith.addf %49, %50 : vector<2x64xf32>
    %52 = math.tanh %51 : vector<2x64xf32>
    %cst_22 = arith.constant dense<0.000000e+00> : vector<2x64xf32>
    %53 = tpu.matmul %1, %5, %cst_22 {dimension_numbers = #tpu.dot_dimension_numbers<[1], [0], [0], [1], [0, 0, 1, 1], [], []>} : vector<2x32xf32>, vector<32x64xf32>, vector<2x64xf32> -> vector<2x64xf32>
    %54 = vector.broadcast %11 : vector<1x64xf32> to vector<2x64xf32>
    %55 = arith.addf %53, %54 : vector<2x64xf32>
    %56 = math.tanh %55 : vector<2x64xf32>
    %57 = arith.mulf %52, %56 : vector<2x64xf32>
    %58 = math.tanh %57 : vector<2x64xf32>
    %cst_23 = arith.constant dense<0.000000e+00> : vector<2x128xf32>
    %59 = tpu.matmul %58, %7, %cst_23 {dimension_numbers = #tpu.dot_dimension_numbers<[1], [0], [0], [1], [0, 0, 1, 1], [], []>} : vector<2x64xf32>, vector<64x128xf32>, vector<2x128xf32> -> vector<2x128xf32>
    %60 = vector.broadcast %13 : vector<1x128xf32> to vector<2x128xf32>
    %61 = arith.addf %59, %60 : vector<2x128xf32>
    %c0_24 = arith.constant 0 : index
    %c0_25 = arith.constant 0 : index
    %62 = vector.load %arg4[%c0_24, %c0_25] : memref<2x128xf32, #tpu.memory_space<vmem>>, vector<2x128xf32>
    tpu.vector_store %arg4[%c0_24, %c0_25], %61 {strides = array<i32>} : memref<2x128xf32, #tpu.memory_space<vmem>>, vector<2x128xf32>,
    return
  }
  func.func @transform_0(%arg0: i32) -> (i32, i32) {
    %c0_i32 = arith.constant 0 : i32
    %c0_i32_0 = arith.constant 0 : i32
    %c0_i32_1 = arith.constant 0 : i32
    return %c0_i32, %c0_i32_0 : i32, i32
  }
  func.func @transform_1(%arg0: i32) -> (i32, i32) {
    %c0_i32 = arith.constant 0 : i32
    %c0_i32_0 = arith.constant 0 : i32
    %c0_i32_1 = arith.constant 0 : i32
    return %c0_i32, %c0_i32_0 : i32, i32
  }
  func.func @transform_2(%arg0: i32) -> (i32, i32) {
    %c0_i32 = arith.constant 0 : i32
    %c0_i32_0 = arith.constant 0 : i32
    %c0_i32_1 = arith.constant 0 : i32
    return %c0_i32, %c0_i32_0 : i32, i32
  }
  func.func @transform_3(%arg0: i32) -> (i32, i32) {
    %c0_i32 = arith.constant 0 : i32
    %c0_i32_0 = arith.constant 0 : i32
    %c0_i32_1 = arith.constant 0 : i32
    return %c0_i32, %c0_i32_0 : i32, i32
  }
}

</mosaic_0001>

<llo_original>
// kernel: tpu_custom_call.1
$region0: #{tpu_custom_call.1}
  #allocation0 [shape = 'u32[]', space=smem, size = 0x4, offset = 0x4, fixed_abs, tag = 'smem constant byte address 0x4 - core index']
  #allocation1 [shape = 'u32[144,128]{1,0:T(1,128)}', space=vmem, size = 0x12000, scoped, tag = 'internal scratch']
  %s0 = inlined_call_operand.hbm [shape: f32[32,32], index: 0, kind: input, shape index: {}]
  %s1 = inlined_call_operand.vmem [shape: f32[2,32], index: 1, kind: input, shape index: {}]
  %s2 = inlined_call_operand.hbm [shape: f32[264,128], index: 2, kind: input, shape index: {}]
  %s3 = inlined_call_operand.hbm [shape: f32[2,128], index: 3, kind: output, shape index: {}]
  %s4 = sld [smem:[#allocation0]]
  $region30: #{tpu_custom_call.1} parent=0
    _
  %s6 = ssub.s32 1, %s4
  %s7 = scalar_select 0, %s6, %s4
  $region1: #{tpu_custom_call.1} parent=0
    #allocation2 [shape = 'u8[16384]{0}', space=vmem, size = 0x4000, scoped, tag = 'input window, operand 0, single buffered']
    #allocation3 [shape = 's32[1]{0}', space=sflag, size = 0x4, scoped, tag = 'scoped memory for tpu_custom_call.1']
    #allocation4 [shape = 's32[1]{0}', space=sflag, size = 0x4, scoped, tag = 'scoped memory for tpu_custom_call.1']
    #allocation5 [shape = 'u8[135168]{0}', space=vmem, size = 0x21000, scoped, tag = 'input window, operand 2, single buffered']
    #allocation6 [shape = 's32[1]{0}', space=sflag, size = 0x4, scoped, tag = 'scoped memory for tpu_custom_call.1']
    #allocation7 [shape = 'u8[1024]{0}', space=vmem, size = 0x400, scoped, tag = 'output window, operand 0, single buffered']
    %8 = vsyncpa [#allocation3], 0
    %9 = vsyncpa [#allocation6], 0
    %10 = vsyncpa [#allocation4], 0
    // Predicated region
    $region2: #{tpu_custom_call.1} parent=1 // pred_check
      _
    $region3: #{tpu_custom_call.1} parent=1 // pred_check_branch
      %12 = sbr.rel (0) target = $region5
    $region4: #{tpu_custom_call.1} parent=1 // pred_region
      %s14 = ssub.s32 512, 512
      %15 = vsyncadd [#allocation3], %s14
      %s16 = sshll.u32 [#allocation2], 4
      %s17 = int_to_ptr.vmem [resolvable:$true] %s16
      %22 = dma.hbm_to_vmem [thread:$0]  %s0, 512, %s17, [#allocation3], 128, 128, 8
    $region5: #{tpu_custom_call.1} parent=1 // pred_fallthru
      _
    // Predicated region
    $region6: #{tpu_custom_call.1} parent=1 // pred_check
      _
    $region7: #{tpu_custom_call.1} parent=1 // pred_check_branch
      %24 = sbr.rel (0) target = $region9
    $region8: #{tpu_custom_call.1} parent=1 // pred_region
      _
    $region9: #{tpu_custom_call.1} parent=1 // pred_fallthru
      _
    // Predicated region
    $region10: #{tpu_custom_call.1} parent=1 // pred_check
      _
    $region11: #{tpu_custom_call.1} parent=1 // pred_check_branch
      %26 = sbr.rel (0) target = $region13
    $region12: #{tpu_custom_call.1} parent=1 // pred_region
      %s28 = ssub.s32 4224, 4224
      %29 = vsyncadd [#allocation6], %s28
      %s30 = sshll.u32 [#allocation5], 4
      %s31 = int_to_ptr.vmem [resolvable:$true] %s30
      %36 = dma.hbm_to_vmem [thread:$0]  %s2, 4224, %s31, [#allocation6], 128, 128, 8
    $region13: #{tpu_custom_call.1} parent=1 // pred_fallthru
      _
    // Predicated region
    $region14: #{tpu_custom_call.1} parent=1 // pred_check
      _
    $region15: #{tpu_custom_call.1} parent=1 // pred_check_branch
      %38 = sbr.rel (0) target = $region17
    $region16: #{tpu_custom_call.1} parent=1 // pred_region
      %39 = dma.done [#allocation3], 512
    $region17: #{tpu_custom_call.1} parent=1 // pred_fallthru
      _
    // Predicated region
    $region18: #{tpu_custom_call.1} parent=1 // pred_check
      _
    $region19: #{tpu_custom_call.1} parent=1 // pred_check_branch
      %41 = sbr.rel (0) target = $region21
    $region20: #{tpu_custom_call.1} parent=1 // pred_region
      %42 = dma.done [#allocation6], 4224
    $region21: #{tpu_custom_call.1} parent=1 // pred_fallthru
      _
    %v43 = vld [vmem:[#allocation2] sm:$0xff]
    %v44 = vld [vmem:[#allocation2 + $0x8] sm:$0xff]
    %v45 = vld [vmem:[#allocation2 + $0x10] sm:$0xff]
    %v46 = vld [vmem:[#allocation2 + $0x18] sm:$0xff]
    %v47 = vld [vmem:[%s1] sm:$0x3]
    %v48 = vld [vmem:[#allocation5] sm:$0xff]
    %v49 = vld [vmem:[#allocation5 + $0x8] sm:$0xff]
    %v50 = vld [vmem:[#allocation5 + $0x10] sm:$0xff]
    %v51 = vld [vmem:[#allocation5 + $0x18] sm:$0xff]
    %v52 = vld [vmem:[#allocation5 + $0x20] sm:$0xff]
    %v53 = vld [vmem:[#allocation5 + $0x28] sm:$0xff]
    %v54 = vld [vmem:[#allocation5 + $0x30] sm:$0xff]
    %v55 = vld [vmem:[#allocation5 + $0x38] sm:$0xff]
    %v56 = vld [vmem:[#allocation5 + $0x40] sm:$0xff]
    %v57 = vld [vmem:[#allocation5 + $0x48] sm:$0xff]
    %v58 = vld [vmem:[#allocation5 + $0x50] sm:$0xff]
    %v59 = vld [vmem:[#allocation5 + $0x58] sm:$0xff]
    %v60 = vld [vmem:[#allocation5 + $0x60] sm:$0xff]
    %v61 = vld [vmem:[#allocation5 + $0x68] sm:$0xff]
    %v62 = vld [vmem:[#allocation5 + $0x70] sm:$0xff]
    %v63 = vld [vmem:[#allocation5 + $0x78] sm:$0xff]
    %v64 = vld [vmem:[#allocation5 + $0x80] sm:$0xff]
    %v65 = vld [vmem:[#allocation5 + $0x88] sm:$0xff]
    %v66 = vld [vmem:[#allocation5 + $0x90] sm:$0xff]
    %v67 = vld [vmem:[#allocation5 + $0x98] sm:$0xff]
    %v68 = vld [vmem:[#allocation5 + $0xa0] sm:$0xff]
    %v69 = vld [vmem:[#allocation5 + $0xa8] sm:$0xff]
    %v70 = vld [vmem:[#allocation5 + $0xb0] sm:$0xff]
    %v71 = vld [vmem:[#allocation5 + $0xb8] sm:$0xff]
    %v72 = vld [vmem:[#allocation5 + $0xc0] sm:$0xff]
    %v73 = vld [vmem:[#allocation5 + $0xc8] sm:$0xff]
    %v74 = vld [vmem:[#allocation5 + $0xd0] sm:$0xff]
    %v75 = vld [vmem:[#allocation5 + $0xd8] sm:$0xff]
    %v76 = vld [vmem:[#allocation5 + $0xe0] sm:$0xff]
    %v77 = vld [vmem:[#allocation5 + $0xe8] sm:$0xff]
    %v78 = vld [vmem:[#allocation5 + $0xf0] sm:$0xff]
    %v79 = vld [vmem:[#allocation5 + $0xf8] sm:$0xff]
    %v80 = vld [vmem:[#allocation5 + $0x100] sm:$0x1]
    %v81 = vld [vmem:[#allocation5 + $0x101] sm:$0x1]
    %v82 = vld [vmem:[#allocation5 + $0x102] sm:$0x1]
    %v83 = vld [vmem:[#allocation5 + $0x103] sm:$0x1]
    %v84 = vld [vmem:[#allocation5 + $0x104] sm:$0x1]
    %v85 = vld [vmem:[#allocation5 + $0x105] sm:$0x1]
    %v86 = vlaneseq
    %v87 = vshrl.u32 %v86, 7
    %v88 = vsub.s32 0, %v87
    %v89 = vrot.slane %v80, %v88
    %vm90 = vcmask 261120
    %v92 = vsel %vm90, %v43, 0
    %v95 = vsel %vm90, %v44, 0
    %v98 = vsel %vm90, %v45, 0
    %v101 = vsel %vm90, %v46, 0
    %103 = vmatprep.subr.mxu0 0.0
    %104 = vmatpush1.msra.mxu0 %v48
    %105 = vmatprep.subr.mxu0 0.0
    %106 = vmatpush1.msra.mxu0 %v49
    %107 = vmatprep.subr.mxu0 0.0
    %108 = vmatpush1.msra.mxu0 %v50
    %109 = vmatprep.subr.mxu0 0.0
    %110 = vmatpush1.msra.mxu0 %v51
    %111 = vmatprep.subr.mxu0 0.0
    %112 = vmatpush1.msra.mxu0 0.0
    %113 = vmatprep.subr.mxu0 0.0
    %114 = vmatpush1.msra.mxu0 0.0
    %115 = vmatprep.subr.mxu0 0.0
    %116 = vmatpush1.msra.mxu0 0.0
    %117 = vmatprep.subr.mxu0 0.0
    %118 = vmatpush1.msra.mxu0 0.0
    %119 = vmatprep.subr.mxu0 0.0
    %120 = vmatpush1.msra.mxu0 0.0
    %121 = vmatprep.subr.mxu0 0.0
    %122 = vmatpush1.msra.mxu0 0.0
    %123 = vmatprep.subr.mxu0 0.0
    %124 = vmatpush1.msra.mxu0 0.0
    %125 = vmatprep.subr.mxu0 0.0
    %126 = vmatpush1.msra.mxu0 0.0
    %127 = vmatprep.subr.mxu0 0.0
    %128 = vmatpush1.msra.mxu0 0.0
    %129 = vmatprep.subr.mxu0 0.0
    %130 = vmatpush1.msra.mxu0 0.0
    %131 = vmatprep.subr.mxu0 0.0
    %132 = vmatpush1.msra.mxu0 0.0
    %133 = vmatprep.subr.mxu0 0.0
    %134 = vmatpush1.msra.mxu0 0.0
    %135 = vmatprep.subr.mxu0 0.0
    %136 = vmatpush1.msra.mxu0 0.0
    %137 = vmatprep.subr.mxu0 0.0
    %138 = vmatpush1.msra.mxu0 0.0
    %139 = vmatprep.subr.mxu0 0.0
    %140 = vmatpush1.msra.mxu0 0.0
    %141 = vmatprep.subr.mxu0 0.0
    %142 = vmatpush1.msra.mxu0 0.0
    %143 = vmatprep.subr.mxu0 0.0
    %144 = vmatpush1.msra.mxu0 0.0
    %145 = vmatprep.subr.mxu0 0.0
    %146 = vmatpush1.msra.mxu0 0.0
    %147 = vmatprep.subr.mxu0 0.0
    %148 = vmatpush1.msra.mxu0 0.0
    %149 = vmatprep.subr.mxu0 0.0
    %150 = vmatpush1.msra.mxu0 0.0
    %151 = vmatprep.subr.mxu0 0.0
    %152 = vmatpush1.msra.mxu0 0.0
    %153 = vmatprep.subr.mxu0 0.0
    %154 = vmatpush1.msra.mxu0 0.0
    %155 = vmatprep.subr.mxu0 0.0
    %156 = vmatpush1.msra.mxu0 0.0
    %157 = vmatprep.subr.mxu0 0.0
    %158 = vmatpush1.msra.mxu0 0.0
    %159 = vmatprep.subr.mxu0 0.0
    %160 = vmatpush1.msra.mxu0 0.0
    %161 = vmatprep.subr.mxu0 0.0
    %162 = vmatpush1.msra.mxu0 0.0
    %163 = vmatprep.subr.mxu0 0.0
    %164 = vmatpush1.msra.mxu0 0.0
    %165 = vmatprep.subr.mxu0 0.0
    %166 = vmatpush1.msra.mxu0 0.0
    %167 = vmatprep.mubr.f32.mxu0 0.0
    %168 = vmatmul.mubr.f32.gmra.mrb[0].mxu0 %v92
    %v169 = vpop.f32.mrb[0].mxu0
    %v170 = vadd.f32 %v89, %v169
    %v171 = vpop.f32.mrb[0].mxu0
    %172 = vmatprep.mubr.f32.mxu0 0.0
    %173 = vmatmul.mubr.f32.gmra.mrb[0].mxu0 %v95
    %v174 = vpop.f32.mrb[0].mxu0
    %v175 = vadd.f32 %v89, %v174
    %v176 = vpop.f32.mrb[0].mxu0
    %177 = vmatprep.mubr.f32.mxu0 0.0
    %178 = vmatmul.mubr.f32.gmra.mrb[0].mxu0 %v98
    %v179 = vpop.f32.mrb[0].mxu0
    %v180 = vadd.f32 %v89, %v179
    %v181 = vpop.f32.mrb[0].mxu0
    %182 = vmatprep.mubr.f32.mxu0 0.0
    %183 = vmatmul.mubr.f32.gmra.mrb[0].mxu0 %v101
    %v184 = vpop.f32.mrb[0].mxu0
    %v185 = vadd.f32 %v89, %v184
    %v186 = vpop.f32.mrb[0].mxu0
    %187 = vdwg.mxu0
    %v188 = vtanh.pop %v170
    %v189 = vtanh.pop %v175
    %v190 = vtanh.pop %v180
    %v191 = vtanh.pop %v185
    %v192 = vlaneseq
    %v193 = vshrl.u32 %v192, 7
    %v194 = vsub.s32 0, %v193
    %v195 = vrot.slane %v81, %v194
    %v197 = vsel %vm90, %v47, 0
    %199 = vmatprep.subr.mxu0 0.0
    %200 = vmatpush1.msra.mxu0 %v52
    %201 = vmatprep.subr.mxu0 0.0
    %202 = vmatpush1.msra.mxu0 %v53
    %203 = vmatprep.subr.mxu0 0.0
    %204 = vmatpush1.msra.mxu0 %v54
    %205 = vmatprep.subr.mxu0 0.0
    %206 = vmatpush1.msra.mxu0 %v55
    %207 = vmatprep.subr.mxu0 0.0
    %208 = vmatpush1.msra.mxu0 0.0
    %209 = vmatprep.subr.mxu0 0.0
    %210 = vmatpush1.msra.mxu0 0.0
    %211 = vmatprep.subr.mxu0 0.0
    %212 = vmatpush1.msra.mxu0 0.0
    %213 = vmatprep.subr.mxu0 0.0
    %214 = vmatpush1.msra.mxu0 0.0
    %215 = vmatprep.subr.mxu0 0.0
    %216 = vmatpush1.msra.mxu0 0.0
    %217 = vmatprep.subr.mxu0 0.0
    %218 = vmatpush1.msra.mxu0 0.0
    %219 = vmatprep.subr.mxu0 0.0
    %220 = vmatpush1.msra.mxu0 0.0
    %221 = vmatprep.subr.mxu0 0.0
    %222 = vmatpush1.msra.mxu0 0.0
    %223 = vmatprep.subr.mxu0 0.0
    %224 = vmatpush1.msra.mxu0 0.0
    %225 = vmatprep.subr.mxu0 0.0
    %226 = vmatpush1.msra.mxu0 0.0
    %227 = vmatprep.subr.mxu0 0.0
    %228 = vmatpush1.msra.mxu0 0.0
    %229 = vmatprep.subr.mxu0 0.0
    %230 = vmatpush1.msra.mxu0 0.0
    %231 = vmatprep.subr.mxu0 0.0
    %232 = vmatpush1.msra.mxu0 0.0
    %233 = vmatprep.subr.mxu0 0.0
    %234 = vmatpush1.msra.mxu0 0.0
    %235 = vmatprep.subr.mxu0 0.0
    %236 = vmatpush1.msra.mxu0 0.0
    %237 = vmatprep.subr.mxu0 0.0
    %238 = vmatpush1.msra.mxu0 0.0
    %239 = vmatprep.subr.mxu0 0.0
    %240 = vmatpush1.msra.mxu0 0.0
    %241 = vmatprep.subr.mxu0 0.0
    %242 = vmatpush1.msra.mxu0 0.0
    %243 = vmatprep.subr.mxu0 0.0
    %244 = vmatpush1.msra.mxu0 0.0
    %245 = vmatprep.subr.mxu0 0.0
    %246 = vmatpush1.msra.mxu0 0.0
    %247 = vmatprep.subr.mxu0 0.0
    %248 = vmatpush1.msra.mxu0 0.0
    %249 = vmatprep.subr.mxu0 0.0
    %250 = vmatpush1.msra.mxu0 0.0
    %251 = vmatprep.subr.mxu0 0.0
    %252 = vmatpush1.msra.mxu0 0.0
    %253 = vmatprep.subr.mxu0 0.0
    %254 = vmatpush1.msra.mxu0 0.0
    %255 = vmatprep.subr.mxu0 0.0
    %256 = vmatpush1.msra.mxu0 0.0
    %257 = vmatprep.subr.mxu0 0.0
    %258 = vmatpush1.msra.mxu0 0.0
    %259 = vmatprep.subr.mxu0 0.0
    %260 = vmatpush1.msra.mxu0 0.0
    %261 = vmatprep.subr.mxu0 0.0
    %262 = vmatpush1.msra.mxu0 0.0
    %263 = vmatprep.mubr.f32.mxu0 0.0
    %264 = vmatmul.mubr.f32.gmra.mrb[0].mxu0 %v197
    %v265 = vpop.f32.mrb[0].mxu0
    %v266 = vadd.f32 %v195, %v265
    %v267 = vpop.f32.mrb[0].mxu0
    %268 = vdwg.mxu0
    %v269 = vtanh.pop %v266
    %v272 = vunpack.c.l.s4 1966171168
    %v273 = vunpack.c.0.s8 %v272
    %v274 = vlaneseq
    %v275 = vshrl.u32 %v274, 7
    %v276 = vsub.s32 %v273, %v275
    %v277 = vrot.slane %v269, %v276
    %v278 = vcombine.high %v277, %v277
    %v280 = vunpack.c.l.s4 1966171168
    %v281 = vunpack.c.0.s8 %v280
    %v282 = vlaneseq
    %v283 = vshrl.u32 %v282, 7
    %v284 = vsub.s32 %v281, %v283
    %v285 = vrot.slane %v277, %v284
    %v287 = vunpack.c.l.s4 1966171168
    %v288 = vunpack.c.0.s8 %v287
    %v289 = vlaneseq
    %v290 = vshrl.u32 %v289, 7
    %v291 = vsub.s32 %v288, %v290
    %v292 = vrot.slane %v278, %v291
    %v293 = vlaneseq
    %v294 = vshrl.u32 %v293, 7
    %v295 = vsub.s32 0, %v294
    %v296 = vrot.slane %v285, %v295
    %v297 = vlaneseq
    %v298 = vshrl.u32 %v297, 7
    %v299 = vsub.s32 0, %v298
    %v300 = vrot.slane %v292, %v299
    %v303 = vmul.f32 %v188, %v296
    %v304 = vmul.f32 %v189, %v296
    %v305 = vmul.f32 %v190, %v300
    %v306 = vmul.f32 %v191, %v300
    %v307 = vtanh.pop %v303
    %v308 = vtanh.pop %v304
    %v309 = vtanh.pop %v305
    %v310 = vtanh.pop %v306
    %v311 = vlaneseq
    %v312 = vshrl.u32 %v311, 7
    %v313 = vsub.s32 0, %v312
    %v314 = vrot.slane %v82, %v313
    %v316 = vsel %vm90, %v307, 0
    %v319 = vsel %vm90, %v308, 0
    %v322 = vsel %vm90, %v309, 0
    %v325 = vsel %vm90, %v310, 0
    %327 = vmatprep.subr.mxu0 0.0
    %328 = vmatpush1.msra.mxu0 %v56
    %329 = vmatprep.subr.mxu0 0.0
    %330 = vmatpush1.msra.mxu0 %v57
    %331 = vmatprep.subr.mxu0 0.0
    %332 = vmatpush1.msra.mxu0 %v58
    %333 = vmatprep.subr.mxu0 0.0
    %334 = vmatpush1.msra.mxu0 %v59
    %335 = vmatprep.subr.mxu0 0.0
    %336 = vmatpush1.msra.mxu0 0.0
    %337 = vmatprep.subr.mxu0 0.0
    %338 = vmatpush1.msra.mxu0 0.0
    %339 = vmatprep.subr.mxu0 0.0
    %340 = vmatpush1.msra.mxu0 0.0
    %341 = vmatprep.subr.mxu0 0.0
    %342 = vmatpush1.msra.mxu0 0.0
    %343 = vmatprep.subr.mxu0 0.0
    %344 = vmatpush1.msra.mxu0 0.0
    %345 = vmatprep.subr.mxu0 0.0
    %346 = vmatpush1.msra.mxu0 0.0
    %347 = vmatprep.subr.mxu0 0.0
    %348 = vmatpush1.msra.mxu0 0.0
    %349 = vmatprep.subr.mxu0 0.0
    %350 = vmatpush1.msra.mxu0 0.0
    %351 = vmatprep.subr.mxu0 0.0
    %352 = vmatpush1.msra.mxu0 0.0
    %353 = vmatprep.subr.mxu0 0.0
    %354 = vmatpush1.msra.mxu0 0.0
    %355 = vmatprep.subr.mxu0 0.0
    %356 = vmatpush1.msra.mxu0 0.0
    %357 = vmatprep.subr.mxu0 0.0
    %358 = vmatpush1.msra.mxu0 0.0
    %359 = vmatprep.subr.mxu0 0.0
    %360 = vmatpush1.msra.mxu0 0.0
    %361 = vmatprep.subr.mxu0 0.0
    %362 = vmatpush1.msra.mxu0 0.0
    %363 = vmatprep.subr.mxu0 0.0
    %364 = vmatpush1.msra.mxu0 0.0
    %365 = vmatprep.subr.mxu0 0.0
    %366 = vmatpush1.msra.mxu0 0.0
    %367 = vmatprep.subr.mxu0 0.0
    %368 = vmatpush1.msra.mxu0 0.0
    %369 = vmatprep.subr.mxu0 0.0
    %370 = vmatpush1.msra.mxu0 0.0
    %371 = vmatprep.subr.mxu0 0.0
    %372 = vmatpush1.msra.mxu0 0.0
    %373 = vmatprep.subr.mxu0 0.0
    %374 = vmatpush1.msra.mxu0 0.0
    %375 = vmatprep.subr.mxu0 0.0
    %376 = vmatpush1.msra.mxu0 0.0
    %377 = vmatprep.subr.mxu0 0.0
    %378 = vmatpush1.msra.mxu0 0.0
    %379 = vmatprep.subr.mxu0 0.0
    %380 = vmatpush1.msra.mxu0 0.0
    %381 = vmatprep.subr.mxu0 0.0
    %382 = vmatpush1.msra.mxu0 0.0
    %383 = vmatprep.subr.mxu0 0.0
    %384 = vmatpush1.msra.mxu0 0.0
    %385 = vmatprep.subr.mxu0 0.0
    %386 = vmatpush1.msra.mxu0 0.0
    %387 = vmatprep.subr.mxu0 0.0
    %388 = vmatpush1.msra.mxu0 0.0
    %389 = vmatprep.subr.mxu0 0.0
    %390 = vmatpush1.msra.mxu0 0.0
    %391 = vmatprep.mubr.f32.mxu0 0.0
    %392 = vmatmul.mubr.f32.gmra.mrb[0].mxu0 %v316
    %v393 = vpop.f32.mrb[0].mxu0
    %v394 = vadd.f32 %v314, %v393
    %v395 = vpop.f32.mrb[0].mxu0
    %396 = vmatprep.mubr.f32.mxu0 0.0
    %397 = vmatmul.mubr.f32.gmra.mrb[0].mxu0 %v319
    %v398 = vpop.f32.mrb[0].mxu0
    %v399 = vadd.f32 %v314, %v398
    %v400 = vpop.f32.mrb[0].mxu0
    %401 = vmatprep.mubr.f32.mxu0 0.0
    %402 = vmatmul.mubr.f32.gmra.mrb[0].mxu0 %v322
    %v403 = vpop.f32.mrb[0].mxu0
    %v404 = vadd.f32 %v314, %v403
    %v405 = vpop.f32.mrb[0].mxu0
    %406 = vmatprep.mubr.f32.mxu0 0.0
    %407 = vmatmul.mubr.f32.gmra.mrb[0].mxu0 %v325
    %v408 = vpop.f32.mrb[0].mxu0
    %v409 = vadd.f32 %v314, %v408
    %v410 = vpop.f32.mrb[0].mxu0
    %411 = vdwg.mxu0
    %vm412 = vcmask 15360
    %v413 = vsel %vm412, %v394, -inf
    %v414 = vsel %vm412, %v399, -inf
    %v415 = vmax.f32 %v413, %v414
    %v416 = vrot.slane %v415, 4
    %v417 = vmax.f32 %v415, %v416
    %v418 = vrot.slane %v417, 2
    %v419 = vmax.f32 %v417, %v418
    %v420 = vrot.slane %v419, 1
    %v421 = vmax.f32 %v419, %v420
    %v422 = vsel %vm412, %v404, -inf
    %v423 = vsel %vm412, %v409, -inf
    %v424 = vmax.f32 %v422, %v423
    %v425 = vrot.slane %v424, 4
    %v426 = vmax.f32 %v424, %v425
    %v427 = vrot.slane %v426, 2
    %v428 = vmax.f32 %v426, %v427
    %v429 = vrot.slane %v428, 1
    %v430 = vmax.f32 %v428, %v429
    %v431 = vsub.f32 %v394, %v421
    %v432 = vsub.f32 %v399, %v421
    %v433 = vsub.f32 %v404, %v430
    %v434 = vsub.f32 %v409, %v430
    %v435 = vmul.f32 %v431, 1.442695
    %v436 = vpow.pop %v435
    %v437 = vmul.f32 %v432, 1.442695
    %v438 = vpow.pop %v437
    %v439 = vmul.f32 %v433, 1.442695
    %v440 = vpow.pop %v439
    %v441 = vmul.f32 %v434, 1.442695
    %v442 = vpow.pop %v441
    %v443 = vsel %vm412, %v436, 0.0
    %v444 = vsel %vm412, %v438, 0.0
    %v445 = vadd.f32 %v443, %v444
    %v446 = vrot.slane %v445, 4
    %v447 = vadd.f32 %v445, %v446
    %v448 = vrot.slane %v447, 2
    %v449 = vadd.f32 %v447, %v448
    %v450 = vrot.slane %v449, 1
    %v451 = vadd.f32 %v449, %v450
    %v452 = vsel %vm412, %v440, 0.0
    %v453 = vsel %vm412, %v442, 0.0
    %v454 = vadd.f32 %v452, %v453
    %v455 = vrot.slane %v454, 4
    %v456 = vadd.f32 %v454, %v455
    %v457 = vrot.slane %v456, 2
    %v458 = vadd.f32 %v456, %v457
    %v459 = vrot.slane %v458, 1
    %v460 = vadd.f32 %v458, %v459
    %v461 = vrcp.pop %v451
    %v462 = vrcp.pop %v460
    %v463 = vmul.f32 %v436, %v461
    %v464 = vmul.f32 %v438, %v461
    %v465 = vmul.f32 %v440, %v462
    %v466 = vmul.f32 %v442, %v462
    %467 = vxpose.xlu0.b32.start [1/16] %v463, 128
    %468 = vxpose.xlu0.b32.cont [2/16] %v464, 128
    %469 = vxpose.xlu0.b32.cont [3/16] 0.0, 128
    %470 = vxpose.xlu0.b32.cont [4/16] 0.0, 128
    %471 = vxpose.xlu0.b32.cont [5/16] 0.0, 128
    %472 = vxpose.xlu0.b32.cont [6/16] 0.0, 128
    %473 = vxpose.xlu0.b32.cont [7/16] 0.0, 128
    %474 = vxpose.xlu0.b32.cont [8/16] 0.0, 128
    %475 = vxpose.xlu0.b32.cont [9/16] 0.0, 128
    %476 = vxpose.xlu0.b32.cont [10/16] 0.0, 128
    %477 = vxpose.xlu0.b32.cont [11/16] 0.0, 128
    %478 = vxpose.xlu0.b32.cont [12/16] 0.0, 128
    %479 = vxpose.xlu0.b32.cont [13/16] 0.0, 128
    %480 = vxpose.xlu0.b32.cont [14/16] 0.0, 128
    %481 = vxpose.xlu0.b32.cont [15/16] 0.0, 128
    %482 = vxpose.xlu0.b32.end [16/16] 0.0, 128
    %v483 = vpop.trf.xlu0
    %v484 = vpop.trf.xlu0
    %v485 = vpop.trf.xlu0
    %v486 = vpop.trf.xlu0
    %v487 = vpop.trf.xlu0
    %v488 = vpop.trf.xlu0
    %v489 = vpop.trf.xlu0
    %v490 = vpop.trf.xlu0
    %v491 = vpop.trf.xlu0
    %v492 = vpop.trf.xlu0
    %v493 = vpop.trf.xlu0
    %v494 = vpop.trf.xlu0
    %v495 = vpop.trf.xlu0
    %v496 = vpop.trf.xlu0
    %v497 = vpop.trf.xlu0
    %v498 = vpop.trf.xlu0
    %vm499 = vcmask 130048
    %v501 = vsel %vm499, %v483, 0
    %503 = vmatprep.subr.mxu0 0.0
    %504 = vmatpush1.msra.mxu0 %v43
    %505 = vmatprep.subr.mxu0 0.0
    %506 = vmatpush1.msra.mxu0 %v44
    %507 = vmatprep.subr.mxu0 0.0
    %508 = vmatpush1.msra.mxu0 0.0
    %509 = vmatprep.subr.mxu0 0.0
    %510 = vmatpush1.msra.mxu0 0.0
    %511 = vmatprep.subr.mxu0 0.0
    %512 = vmatpush1.msra.mxu0 0.0
    %513 = vmatprep.subr.mxu0 0.0
    %514 = vmatpush1.msra.mxu0 0.0
    %515 = vmatprep.subr.mxu0 0.0
    %516 = vmatpush1.msra.mxu0 0.0
    %517 = vmatprep.subr.mxu0 0.0
    %518 = vmatpush1.msra.mxu0 0.0
    %519 = vmatprep.subr.mxu0 0.0
    %520 = vmatpush1.msra.mxu0 0.0
    %521 = vmatprep.subr.mxu0 0.0
    %522 = vmatpush1.msra.mxu0 0.0
    %523 = vmatprep.subr.mxu0 0.0
    %524 = vmatpush1.msra.mxu0 0.0
    %525 = vmatprep.subr.mxu0 0.0
    %526 = vmatpush1.msra.mxu0 0.0
    %527 = vmatprep.subr.mxu0 0.0
    %528 = vmatpush1.msra.mxu0 0.0
    %529 = vmatprep.subr.mxu0 0.0
    %530 = vmatpush1.msra.mxu0 0.0
    %531 = vmatprep.subr.mxu0 0.0
    %532 = vmatpush1.msra.mxu0 0.0
    %533 = vmatprep.subr.mxu0 0.0
    %534 = vmatpush1.msra.mxu0 0.0
    %535 = vmatprep.subr.mxu0 0.0
    %536 = vmatpush1.msra.mxu0 0.0
    %537 = vmatprep.subr.mxu0 0.0
    %538 = vmatpush1.msra.mxu0 0.0
    %539 = vmatprep.subr.mxu0 0.0
    %540 = vmatpush1.msra.mxu0 0.0
    %541 = vmatprep.subr.mxu0 0.0
    %542 = vmatpush1.msra.mxu0 0.0
    %543 = vmatprep.subr.mxu0 0.0
    %544 = vmatpush1.msra.mxu0 0.0
    %545 = vmatprep.subr.mxu0 0.0
    %546 = vmatpush1.msra.mxu0 0.0
    %547 = vmatprep.subr.mxu0 0.0
    %548 = vmatpush1.msra.mxu0 0.0
    %549 = vmatprep.subr.mxu0 0.0
    %550 = vmatpush1.msra.mxu0 0.0
    %551 = vmatprep.subr.mxu0 0.0
    %552 = vmatpush1.msra.mxu0 0.0
    %553 = vmatprep.subr.mxu0 0.0
    %554 = vmatpush1.msra.mxu0 0.0
    %555 = vmatprep.subr.mxu0 0.0
    %556 = vmatpush1.msra.mxu0 0.0
    %557 = vmatprep.subr.mxu0 0.0
    %558 = vmatpush1.msra.mxu0 0.0
    %559 = vmatprep.subr.mxu0 0.0
    %560 = vmatpush1.msra.mxu0 0.0
    %561 = vmatprep.subr.mxu0 0.0
    %562 = vmatpush1.msra.mxu0 0.0
    %563 = vmatprep.subr.mxu0 0.0
    %564 = vmatpush1.msra.mxu0 0.0
    %565 = vmatprep.subr.mxu0 0.0
    %566 = vmatpush1.msra.mxu0 0.0
    %567 = vmatprep.mubr.f32.mxu0 0.0
    %568 = vmatmul.mubr.f32.gmra.mrb[0].mxu0 %v501
    %v569 = vpop.f32.mrb[0].mxu0
    %v570 = vadd.f32 0.0, %v569
    %v571 = vpop.f32.mrb[0].mxu0
    %572 = vdwg.mxu0
    %573 = vxpose.xlu0.b32.start [1/16] %v465, 128
    %574 = vxpose.xlu0.b32.cont [2/16] %v466, 128
    %575 = vxpose.xlu0.b32.cont [3/16] 0.0, 128
    %576 = vxpose.xlu0.b32.cont [4/16] 0.0, 128
    %577 = vxpose.xlu0.b32.cont [5/16] 0.0, 128
    %578 = vxpose.xlu0.b32.cont [6/16] 0.0, 128
    %579 = vxpose.xlu0.b32.cont [7/16] 0.0, 128
    %580 = vxpose.xlu0.b32.cont [8/16] 0.0, 128
    %581 = vxpose.xlu0.b32.cont [9/16] 0.0, 128
    %582 = vxpose.xlu0.b32.cont [10/16] 0.0, 128
    %583 = vxpose.xlu0.b32.cont [11/16] 0.0, 128
    %584 = vxpose.xlu0.b32.cont [12/16] 0.0, 128
    %585 = vxpose.xlu0.b32.cont [13/16] 0.0, 128
    %586 = vxpose.xlu0.b32.cont [14/16] 0.0, 128
    %587 = vxpose.xlu0.b32.cont [15/16] 0.0, 128
    %588 = vxpose.xlu0.b32.end [16/16] 0.0, 128
    %v589 = vpop.trf.xlu0
    %v590 = vpop.trf.xlu0
    %v591 = vpop.trf.xlu0
    %v592 = vpop.trf.xlu0
    %v593 = vpop.trf.xlu0
    %v594 = vpop.trf.xlu0
    %v595 = vpop.trf.xlu0
    %v596 = vpop.trf.xlu0
    %v597 = vpop.trf.xlu0
    %v598 = vpop.trf.xlu0
    %v599 = vpop.trf.xlu0
    %v600 = vpop.trf.xlu0
    %v601 = vpop.trf.xlu0
    %v602 = vpop.trf.xlu0
    %v603 = vpop.trf.xlu0
    %v604 = vpop.trf.xlu0
    %v606 = vsel %vm499, %v589, 0
    %608 = vmatprep.subr.mxu0 0.0
    %609 = vmatpush1.msra.mxu0 %v45
    %610 = vmatprep.subr.mxu0 0.0
    %611 = vmatpush1.msra.mxu0 %v46
    %612 = vmatprep.subr.mxu0 0.0
    %613 = vmatpush1.msra.mxu0 0.0
    %614 = vmatprep.subr.mxu0 0.0
    %615 = vmatpush1.msra.mxu0 0.0
    %616 = vmatprep.subr.mxu0 0.0
    %617 = vmatpush1.msra.mxu0 0.0
    %618 = vmatprep.subr.mxu0 0.0
    %619 = vmatpush1.msra.mxu0 0.0
    %620 = vmatprep.subr.mxu0 0.0
    %621 = vmatpush1.msra.mxu0 0.0
    %622 = vmatprep.subr.mxu0 0.0
    %623 = vmatpush1.msra.mxu0 0.0
    %624 = vmatprep.subr.mxu0 0.0
    %625 = vmatpush1.msra.mxu0 0.0
    %626 = vmatprep.subr.mxu0 0.0
    %627 = vmatpush1.msra.mxu0 0.0
    %628 = vmatprep.subr.mxu0 0.0
    %629 = vmatpush1.msra.mxu0 0.0
    %630 = vmatprep.subr.mxu0 0.0
    %631 = vmatpush1.msra.mxu0 0.0
    %632 = vmatprep.subr.mxu0 0.0
    %633 = vmatpush1.msra.mxu0 0.0
    %634 = vmatprep.subr.mxu0 0.0
    %635 = vmatpush1.msra.mxu0 0.0
    %636 = vmatprep.subr.mxu0 0.0
    %637 = vmatpush1.msra.mxu0 0.0
    %638 = vmatprep.subr.mxu0 0.0
    %639 = vmatpush1.msra.mxu0 0.0
    %640 = vmatprep.subr.mxu0 0.0
    %641 = vmatpush1.msra.mxu0 0.0
    %642 = vmatprep.subr.mxu0 0.0
    %643 = vmatpush1.msra.mxu0 0.0
    %644 = vmatprep.subr.mxu0 0.0
    %645 = vmatpush1.msra.mxu0 0.0
    %646 = vmatprep.subr.mxu0 0.0
    %647 = vmatpush1.msra.mxu0 0.0
    %648 = vmatprep.subr.mxu0 0.0
    %649 = vmatpush1.msra.mxu0 0.0
    %650 = vmatprep.subr.mxu0 0.0
    %651 = vmatpush1.msra.mxu0 0.0
    %652 = vmatprep.subr.mxu0 0.0
    %653 = vmatpush1.msra.mxu0 0.0
    %654 = vmatprep.subr.mxu0 0.0
    %655 = vmatpush1.msra.mxu0 0.0
    %656 = vmatprep.subr.mxu0 0.0
    %657 = vmatpush1.msra.mxu0 0.0
    %658 = vmatprep.subr.mxu0 0.0
    %659 = vmatpush1.msra.mxu0 0.0
    %660 = vmatprep.subr.mxu0 0.0
    %661 = vmatpush1.msra.mxu0 0.0
    %662 = vmatprep.subr.mxu0 0.0
    %663 = vmatpush1.msra.mxu0 0.0
    %664 = vmatprep.subr.mxu0 0.0
    %665 = vmatpush1.msra.mxu0 0.0
    %666 = vmatprep.subr.mxu0 0.0
    %667 = vmatpush1.msra.mxu0 0.0
    %668 = vmatprep.subr.mxu0 0.0
    %669 = vmatpush1.msra.mxu0 0.0
    %670 = vmatprep.subr.mxu0 0.0
    %671 = vmatpush1.msra.mxu0 0.0
    %672 = vmatprep.mubr.f32.mxu0 0.0
    %673 = vmatmul.mubr.f32.gmra.mrb[0].mxu0 %v606
    %v674 = vpop.f32.mrb[0].mxu0
    %v675 = vadd.f32 0.0, %v674
    %v676 = vpop.f32.mrb[0].mxu0
    %677 = vdwg.mxu0
    %v680 = vrot.slane %v675, 7
    %vm681 = vcmask 1041409
    %v682 = vsel %vm681, %v680, %v570
    %v684 = vrot.slane %v570, 1
    %v685 = vsel %vm681, %v675, %v684
    %686 = vrot.lane.b32.xlu0 %v685, 32
    %v687 = vpop.permute.xlu0 %686
    %v689 = vsel %vm90, %v682, %v687
    %v690 = vlaneseq
    %v691 = vshrl.u32 %v690, 7
    %v692 = vsub.s32 0, %v691
    %v693 = vrot.slane %v84, %v692
    %vm694 = vcmask 523264
    %v696 = vsel %vm694, %v689, 0
    %698 = vmatprep.subr.mxu0 0.0
    %699 = vmatpush1.msra.mxu0 %v64
    %700 = vmatprep.subr.mxu0 0.0
    %701 = vmatpush1.msra.mxu0 %v65
    %702 = vmatprep.subr.mxu0 0.0
    %703 = vmatpush1.msra.mxu0 %v66
    %704 = vmatprep.subr.mxu0 0.0
    %705 = vmatpush1.msra.mxu0 %v67
    %706 = vmatprep.subr.mxu0 0.0
    %707 = vmatpush1.msra.mxu0 %v68
    %708 = vmatprep.subr.mxu0 0.0
    %709 = vmatpush1.msra.mxu0 %v69
    %710 = vmatprep.subr.mxu0 0.0
    %711 = vmatpush1.msra.mxu0 %v70
    %712 = vmatprep.subr.mxu0 0.0
    %713 = vmatpush1.msra.mxu0 %v71
    %714 = vmatprep.subr.mxu0 0.0
    %715 = vmatpush1.msra.mxu0 0.0
    %716 = vmatprep.subr.mxu0 0.0
    %717 = vmatpush1.msra.mxu0 0.0
    %718 = vmatprep.subr.mxu0 0.0
    %719 = vmatpush1.msra.mxu0 0.0
    %720 = vmatprep.subr.mxu0 0.0
    %721 = vmatpush1.msra.mxu0 0.0
    %722 = vmatprep.subr.mxu0 0.0
    %723 = vmatpush1.msra.mxu0 0.0
    %724 = vmatprep.subr.mxu0 0.0
    %725 = vmatpush1.msra.mxu0 0.0
    %726 = vmatprep.subr.mxu0 0.0
    %727 = vmatpush1.msra.mxu0 0.0
    %728 = vmatprep.subr.mxu0 0.0
    %729 = vmatpush1.msra.mxu0 0.0
    %730 = vmatprep.subr.mxu0 0.0
    %731 = vmatpush1.msra.mxu0 0.0
    %732 = vmatprep.subr.mxu0 0.0
    %733 = vmatpush1.msra.mxu0 0.0
    %734 = vmatprep.subr.mxu0 0.0
    %735 = vmatpush1.msra.mxu0 0.0
    %736 = vmatprep.subr.mxu0 0.0
    %737 = vmatpush1.msra.mxu0 0.0
    %738 = vmatprep.subr.mxu0 0.0
    %739 = vmatpush1.msra.mxu0 0.0
    %740 = vmatprep.subr.mxu0 0.0
    %741 = vmatpush1.msra.mxu0 0.0
    %742 = vmatprep.subr.mxu0 0.0
    %743 = vmatpush1.msra.mxu0 0.0
    %744 = vmatprep.subr.mxu0 0.0
    %745 = vmatpush1.msra.mxu0 0.0
    %746 = vmatprep.subr.mxu0 0.0
    %747 = vmatpush1.msra.mxu0 0.0
    %748 = vmatprep.subr.mxu0 0.0
    %749 = vmatpush1.msra.mxu0 0.0
    %750 = vmatprep.subr.mxu0 0.0
    %751 = vmatpush1.msra.mxu0 0.0
    %752 = vmatprep.subr.mxu0 0.0
    %753 = vmatpush1.msra.mxu0 0.0
    %754 = vmatprep.subr.mxu0 0.0
    %755 = vmatpush1.msra.mxu0 0.0
    %756 = vmatprep.subr.mxu0 0.0
    %757 = vmatpush1.msra.mxu0 0.0
    %758 = vmatprep.subr.mxu0 0.0
    %759 = vmatpush1.msra.mxu0 0.0
    %760 = vmatprep.subr.mxu0 0.0
    %761 = vmatpush1.msra.mxu0 0.0
    %762 = vmatprep.mubr.f32.mxu0 0.0
    %763 = vmatmul.mubr.f32.gmra.mrb[0].mxu0 %v696
    %v764 = vpop.f32.mrb[0].mxu0
    %v765 = vadd.f32 %v693, %v764
    %v766 = vpop.f32.mrb[0].mxu0
    %767 = vdwg.mxu0
    %v768 = vtanh.pop %v765
    %v769 = vlaneseq
    %v770 = vshrl.u32 %v769, 7
    %v771 = vsub.s32 0, %v770
    %v772 = vrot.slane %v83, %v771
    %773 = vmatprep.subr.mxu0 0.0
    %774 = vmatpush1.msra.mxu0 %v60
    %775 = vmatprep.subr.mxu0 0.0
    %776 = vmatpush1.msra.mxu0 %v61
    %777 = vmatprep.subr.mxu0 0.0
    %778 = vmatpush1.msra.mxu0 %v62
    %779 = vmatprep.subr.mxu0 0.0
    %780 = vmatpush1.msra.mxu0 %v63
    %781 = vmatprep.subr.mxu0 0.0
    %782 = vmatpush1.msra.mxu0 0.0
    %783 = vmatprep.subr.mxu0 0.0
    %784 = vmatpush1.msra.mxu0 0.0
    %785 = vmatprep.subr.mxu0 0.0
    %786 = vmatpush1.msra.mxu0 0.0
    %787 = vmatprep.subr.mxu0 0.0
    %788 = vmatpush1.msra.mxu0 0.0
    %789 = vmatprep.subr.mxu0 0.0
    %790 = vmatpush1.msra.mxu0 0.0
    %791 = vmatprep.subr.mxu0 0.0
    %792 = vmatpush1.msra.mxu0 0.0
    %793 = vmatprep.subr.mxu0 0.0
    %794 = vmatpush1.msra.mxu0 0.0
    %795 = vmatprep.subr.mxu0 0.0
    %796 = vmatpush1.msra.mxu0 0.0
    %797 = vmatprep.subr.mxu0 0.0
    %798 = vmatpush1.msra.mxu0 0.0
    %799 = vmatprep.subr.mxu0 0.0
    %800 = vmatpush1.msra.mxu0 0.0
    %801 = vmatprep.subr.mxu0 0.0
    %802 = vmatpush1.msra.mxu0 0.0
    %803 = vmatprep.subr.mxu0 0.0
    %804 = vmatpush1.msra.mxu0 0.0
    %805 = vmatprep.subr.mxu0 0.0
    %806 = vmatpush1.msra.mxu0 0.0
    %807 = vmatprep.subr.mxu0 0.0
    %808 = vmatpush1.msra.mxu0 0.0
    %809 = vmatprep.subr.mxu0 0.0
    %810 = vmatpush1.msra.mxu0 0.0
    %811 = vmatprep.subr.mxu0 0.0
    %812 = vmatpush1.msra.mxu0 0.0
    %813 = vmatprep.subr.mxu0 0.0
    %814 = vmatpush1.msra.mxu0 0.0
    %815 = vmatprep.subr.mxu0 0.0
    %816 = vmatpush1.msra.mxu0 0.0
    %817 = vmatprep.subr.mxu0 0.0
    %818 = vmatpush1.msra.mxu0 0.0
    %819 = vmatprep.subr.mxu0 0.0
    %820 = vmatpush1.msra.mxu0 0.0
    %821 = vmatprep.subr.mxu0 0.0
    %822 = vmatpush1.msra.mxu0 0.0
    %823 = vmatprep.subr.mxu0 0.0
    %824 = vmatpush1.msra.mxu0 0.0
    %825 = vmatprep.subr.mxu0 0.0
    %826 = vmatpush1.msra.mxu0 0.0
    %827 = vmatprep.subr.mxu0 0.0
    %828 = vmatpush1.msra.mxu0 0.0
    %829 = vmatprep.subr.mxu0 0.0
    %830 = vmatpush1.msra.mxu0 0.0
    %831 = vmatprep.subr.mxu0 0.0
    %832 = vmatpush1.msra.mxu0 0.0
    %833 = vmatprep.subr.mxu0 0.0
    %834 = vmatpush1.msra.mxu0 0.0
    %835 = vmatprep.subr.mxu0 0.0
    %836 = vmatpush1.msra.mxu0 0.0
    %837 = vmatprep.mubr.f32.mxu0 0.0
    %838 = vmatmul.mubr.f32.gmra.mrb[0].mxu0 %v197
    %v839 = vpop.f32.mrb[0].mxu0
    %v840 = vadd.f32 %v772, %v839
    %v841 = vpop.f32.mrb[0].mxu0
    %842 = vdwg.mxu0
    %v843 = vtanh.pop %v840
    %v844 = vmul.f32 %v768, %v843
    %v845 = vtanh.pop %v844
    %v846 = vlaneseq
    %v847 = vshrl.u32 %v846, 7
    %v848 = vsub.s32 0, %v847
    %v849 = vrot.slane %v85, %v848
    %v851 = vsel %vm694, %v845, 0
    %853 = vmatprep.subr.mxu0 0.0
    %854 = vmatpush1.msra.mxu0 %v72
    %855 = vmatprep.subr.mxu0 0.0
    %856 = vmatpush1.msra.mxu0 %v73
    %857 = vmatprep.subr.mxu0 0.0
    %858 = vmatpush1.msra.mxu0 %v74
    %859 = vmatprep.subr.mxu0 0.0
    %860 = vmatpush1.msra.mxu0 %v75
    %861 = vmatprep.subr.mxu0 0.0
    %862 = vmatpush1.msra.mxu0 %v76
    %863 = vmatprep.subr.mxu0 0.0
    %864 = vmatpush1.msra.mxu0 %v77
    %865 = vmatprep.subr.mxu0 0.0
    %866 = vmatpush1.msra.mxu0 %v78
    %867 = vmatprep.subr.mxu0 0.0
    %868 = vmatpush1.msra.mxu0 %v79
    %869 = vmatprep.subr.mxu0 0.0
    %870 = vmatpush1.msra.mxu0 0.0
    %871 = vmatprep.subr.mxu0 0.0
    %872 = vmatpush1.msra.mxu0 0.0
    %873 = vmatprep.subr.mxu0 0.0
    %874 = vmatpush1.msra.mxu0 0.0
    %875 = vmatprep.subr.mxu0 0.0
    %876 = vmatpush1.msra.mxu0 0.0
    %877 = vmatprep.subr.mxu0 0.0
    %878 = vmatpush1.msra.mxu0 0.0
    %879 = vmatprep.subr.mxu0 0.0
    %880 = vmatpush1.msra.mxu0 0.0
    %881 = vmatprep.subr.mxu0 0.0
    %882 = vmatpush1.msra.mxu0 0.0
    %883 = vmatprep.subr.mxu0 0.0
    %884 = vmatpush1.msra.mxu0 0.0
    %885 = vmatprep.subr.mxu0 0.0
    %886 = vmatpush1.msra.mxu0 0.0
    %887 = vmatprep.subr.mxu0 0.0
    %888 = vmatpush1.msra.mxu0 0.0
    %889 = vmatprep.subr.mxu0 0.0
    %890 = vmatpush1.msra.mxu0 0.0
    %891 = vmatprep.subr.mxu0 0.0
    %892 = vmatpush1.msra.mxu0 0.0
    %893 = vmatprep.subr.mxu0 0.0
    %894 = vmatpush1.msra.mxu0 0.0
    %895 = vmatprep.subr.mxu0 0.0
    %896 = vmatpush1.msra.mxu0 0.0
    %897 = vmatprep.subr.mxu0 0.0
    %898 = vmatpush1.msra.mxu0 0.0
    %899 = vmatprep.subr.mxu0 0.0
    %900 = vmatpush1.msra.mxu0 0.0
    %901 = vmatprep.subr.mxu0 0.0
    %902 = vmatpush1.msra.mxu0 0.0
    %903 = vmatprep.subr.mxu0 0.0
    %904 = vmatpush1.msra.mxu0 0.0
    %905 = vmatprep.subr.mxu0 0.0
    %906 = vmatpush1.msra.mxu0 0.0
    %907 = vmatprep.subr.mxu0 0.0
    %908 = vmatpush1.msra.mxu0 0.0
    %909 = vmatprep.subr.mxu0 0.0
    %910 = vmatpush1.msra.mxu0 0.0
    %911 = vmatprep.subr.mxu0 0.0
    %912 = vmatpush1.msra.mxu0 0.0
    %913 = vmatprep.subr.mxu0 0.0
    %914 = vmatpush1.msra.mxu0 0.0
    %915 = vmatprep.subr.mxu0 0.0
    %916 = vmatpush1.msra.mxu0 0.0
    %917 = vmatprep.mubr.f32.mxu0 0.0
    %918 = vmatmul.mubr.f32.gmra.mrb[0].mxu0 %v851
    %v919 = vpop.f32.mrb[0].mxu0
    %v920 = vadd.f32 %v849, %v919
    %v921 = vpop.f32.mrb[0].mxu0
    %922 = vdwg.mxu0
    %923 = vst [vmem:[#allocation7] sm:$0x3] %v920
    // Predicated region
    $region22: #{tpu_custom_call.1} parent=1 // pred_check
      _
    $region23: #{tpu_custom_call.1} parent=1 // pred_check_branch
      %925 = sbr.rel (0) target = $region25
    $region24: #{tpu_custom_call.1} parent=1 // pred_region
      %s927 = ssub.s32 32, 32
      %928 = vsyncadd [#allocation4], %s927
      %s930 = sshll.u32 [#allocation7], 4
      %s931 = int_to_ptr.vmem [resolvable:$true] %s930
      %933 = dma.vmem_to_hbm [thread:$0]  %s931, 32, %s3, [#allocation4]
    $region25: #{tpu_custom_call.1} parent=1 // pred_fallthru
      _
    // Predicated region
    $region26: #{tpu_custom_call.1} parent=1 // pred_check
      _
    $region27: #{tpu_custom_call.1} parent=1 // pred_check_branch
      %935 = sbr.rel (0) target = $region29
    $region28: #{tpu_custom_call.1} parent=1 // pred_region
      %936 = dma.done [#allocation4], 32
    $region29: #{tpu_custom_call.1} parent=1 // pred_fallthru
      _
    %937 = vsyncpa [#allocation3], 1
    %938 = vsyncpa [#allocation6], 1
    %939 = vsyncpa [#allocation4], 1

</llo_original>
